<compile_context>
chip_gen: v6e
topology: v6e:2x2x1
jax: 0.10.0
libtpu: 0.0.40
codegen_flags: <defaults>
</compile_context>

<pallas_src>
import functools

import jax
import jax.numpy as jnp
from jax.experimental import pallas as pl
from jax.experimental.pallas import tpu as pltpu

_LANE = 128


def _round_up(x, m):
    return ((x + m - 1) // m) * m


def _pad2d(a, rows, cols):
    r, c = a.shape
    return jnp.pad(a, ((0, rows - r), (0, cols - c)))


# --------------------------------------------------------------------------
# Kernels
# --------------------------------------------------------------------------
def _sage_layer1_kernel(*refs, apply_dropout, keep_thresh, inv_keep,
                        project_before):
    i = 0
    if apply_dropout:
        seed_ref = refs[0]
        i = 1
    cnt_ref, invdeg_ref, x_full_ref, x_tile_ref, wl1_ref, wr1_ref, b1_ref = \
        refs[i:i + 7]
    rest = refs[i + 7:]
    if project_before:
        wl2_ref, h_ref, z_ref = rest
    else:
        (h_ref,) = rest

    # Mean aggregation: inv_deg * (counts @ x); counts are exact ints in bf16,
    # scaling stays in f32.
    agg = jnp.dot(cnt_ref[...], x_full_ref[...],
                  preferred_element_type=jnp.float32)
    agg = agg * invdeg_ref[...]

    # SAGEConv1: agg @ W_l1 + x @ W_r1 + b1  (two dots, no concat buffer).
    h = jnp.dot(agg.astype(jnp.bfloat16), wl1_ref[...],
                preferred_element_type=jnp.float32)
    h = h + jnp.dot(x_tile_ref[...], wr1_ref[...],
                    preferred_element_type=jnp.float32)
    h = h + b1_ref[...]
    h = jnp.maximum(h, 0.0)                                   # ReLU (f32)

    if apply_dropout:
        # Inverted dropout: raw uint32 bits vs precomputed uint32 threshold.
        pltpu.prng_seed(seed_ref[0] + pl.program_id(0))
        bits = pltpu.prng_random_bits(h.shape)
        if bits.dtype != jnp.uint32:
            bits = pltpu.bitcast(bits, jnp.uint32)
        h = jnp.where(bits < jnp.uint32(keep_thresh),
                      h * jnp.float32(inv_keep), jnp.float32(0.0))

    hb = h.astype(jnp.bfloat16)
    h_ref[...] = hb
    if project_before:
        # z = h @ W_l2 so layer 2 contracts A against the narrower Op dim.
        z_ref[...] = jnp.dot(
            hb, wl2_ref[...],
            preferred_element_type=jnp.float32).astype(z_ref.dtype)


def _sage_layer2_kernel(*refs, project_before):
    cnt_ref, invdeg_ref, m_ref, h_tile_ref = refs[:4]
    if project_before:
        wr2_ref, b2_ref, o_ref = refs[4:]
    else:
        wl2_ref, wr2_ref, b2_ref, o_ref = refs[4:]

    agg = jnp.dot(cnt_ref[...], m_ref[...],
                  preferred_element_type=jnp.float32)
    agg = agg * invdeg_ref[...]
    if project_before:
        out = agg                                  # m_ref held z = h @ W_l2
    else:
        out = jnp.dot(agg.astype(jnp.bfloat16), wl2_ref[...],
                      preferred_element_type=jnp.float32)
    out = out + jnp.dot(h_tile_ref[...], wr2_ref[...],
                        preferred_element_type=jnp.float32)
    out = out + b2_ref[...]
    o_ref[...] = out.astype(o_ref.dtype)


# --------------------------------------------------------------------------
# Wrapper
# --------------------------------------------------------------------------
def build_graph_operands(edge_index, num_nodes, num_nodes_padded):
    """Exact edge counts (bf16, built directly at padded size) + f32 1/deg.

    counts[i, j] = #edges j->i ; inv_deg[i] = 1/deg_in(i) (0 if isolated).
    For static graphs call this once and pass the result via `graph=`.
    """
    del num_nodes
    src, dst = edge_index[0], edge_index[1]
    counts = jnp.zeros((num_nodes_padded, num_nodes_padded), jnp.bfloat16)
    counts = counts.at[dst, src].add(1.0)          # exact integers in bf16
    deg = jnp.sum(counts, axis=1, keepdims=True, dtype=jnp.float32)
    inv_deg = jnp.where(deg > 0, 1.0, 0.0) / jnp.maximum(deg, 1.0)
    return counts, inv_deg.astype(jnp.float32)


def _vmem_need_bytes(tm, np_, fp, hp, op, mdim):
    bb = 2  # bf16
    stream = 3 * tm * np_ * bb                       # A slabs (up to 3 bufs)
    stream += 2 * tm * (fp + hp) * bb + 2 * tm * 4   # x / h row tiles, inv_deg
    resident = 2 * (np_ * fp * bb + np_ * mdim * bb  # x full, z/h full
                    + 2 * fp * hp * bb + 2 * hp * op * bb
                    + (hp + op) * 4)
    outs = 2 * (tm * hp * bb + tm * op * bb + tm * op * 4)
    interm = 4 * tm * (fp + hp + op + mdim)          # f32 compute temporaries
    return stream + resident + outs + interm + (2 << 20)


def graphsage_forward(x, edge_index, params, *, dropout_rate=0.4,
                      training=False, rng_seed=0, graph=None):
    n, f_in = x.shape
    h_dim = params["w_l1"].shape[1]
    f_out = params["w_l2"].shape[1]

    # Lane/sublane-dense padding -> unmasked loads/stores, full MXU tiles.
    # Zero padding is exact (zero A rows/cols, zero weight rows, zero biases).
    np_ = _round_up(n, _LANE)
    fp = _round_up(f_in, _LANE)
    hp = _round_up(h_dim, _LANE)
    op = _round_up(f_out, _LANE)

    project_before = op <= hp          # contract A against min(Hp, Op)
    mdim = op if project_before else hp

    if graph is None:
        graph = build_graph_operands(edge_index, n, np_)
    counts, inv_deg = graph

    x_p = _pad2d(x.astype(jnp.float32), np_, fp).astype(jnp.bfloat16)
    w_l1 = _pad2d(params["w_l1"].astype(jnp.float32), fp, hp).astype(jnp.bfloat16)
    w_r1 = _pad2d(params["w_r1"].astype(jnp.float32), fp, hp).astype(jnp.bfloat16)
    b1 = jnp.pad(params["b_l1"].astype(jnp.float32), (0, hp - h_dim)).reshape(1, hp)
    w_l2 = _pad2d(params["w_l2"].astype(jnp.float32), hp, op).astype(jnp.bfloat16)
    w_r2 = _pad2d(params["w_r2"].astype(jnp.float32), hp, op).astype(jnp.bfloat16)
    b2 = jnp.pad(params["b_l2"].astype(jnp.float32), (0, op - f_out)).reshape(1, op)

    # Generation-aware VMEM budget (v7x: 64 MiB/TC; v5e/v6e: 128 MiB).
    try:
        vmem_cap = int(pltpu.get_tpu_info().vmem_capacity_bytes)
    except Exception:
        vmem_cap = 64 * 1024 * 1024
    vmem_budget = max(min(int(0.75 * vmem_cap), vmem_cap - 16 * 1024 * 1024),
                      24 * 1024 * 1024)

    tm = None
    for cand in (512, 256, 128):
        if np_ % cand == 0 and _vmem_need_bytes(cand, np_, fp, hp, op, mdim) <= vmem_budget:
            tm = cand
            break
    if tm is None:
        # TODO(synk): CSR-gather / column-tiled kernel for graphs whose padded
        # operands do not fit the per-core VMEM budget.
        raise NotImplementedError(
            "graph too large for dense row-tiled adjacency kernel")

    grid = (np_ // tm,)
    n_tiles = grid[0]

    # Triple-buffer the A row-slab only when the grid is deep enough to care
    # (hides A-stream DMA jitter, mainly on v5e's lower HBM bandwidth).
    if n_tiles >= 3:
        cnt_spec = pl.BlockSpec((tm, np_), lambda i: (i, 0),
                                pipeline_mode=pl.Buffered(3))
    else:
        cnt_spec = pl.BlockSpec((tm, np_), lambda i: (i, 0))
    invdeg_spec = pl.BlockSpec((tm, 1), lambda i: (i, 0))

    cparams = pltpu.CompilerParams(
        dimension_semantics=("parallel",),        # megacore sharding on v7x
        vmem_limit_bytes=int(vmem_budget))

    apply_dropout = bool(training) and float(dropout_rate) > 0.0
    keep_prob = 1.0 - float(dropout_rate)
    keep_thresh = min(int(round(keep_prob * 2.0 ** 32)), 2 ** 32 - 1)
    inv_keep = 1.0 / keep_prob if keep_prob > 0.0 else 0.0

    # ---------------- layer 1: h (and z = h @ W_l2 when Op <= Hp) ----------
    kernel1 = functools.partial(
        _sage_layer1_kernel, apply_dropout=apply_dropout,
        keep_thresh=keep_thresh, inv_keep=inv_keep,
        project_before=project_before)

    in_specs_1 = []
    args_1 = []
    if apply_dropout:
        in_specs_1.append(pl.BlockSpec(memory_space=pltpu.MemorySpace.SMEM))
        args_1.append(jnp.asarray([rng_seed], jnp.int32))
    in_specs_1 += [
        cnt_spec,                                       # A counts row slab
        invdeg_spec,                                    # 1/deg rows (f32)
        pl.BlockSpec((np_, fp), lambda i: (0, 0)),      # x full (A contraction)
        pl.BlockSpec((tm, fp), lambda i: (i, 0)),       # x row tile (root term)
        pl.BlockSpec((fp, hp), lambda i: (0, 0)),       # W_l1
        pl.BlockSpec((fp, hp), lambda i: (0, 0)),       # W_r1
        pl.BlockSpec((1, hp), lambda i: (0, 0)),        # b1
    ]
    args_1 += [counts, inv_deg, x_p, x_p, w_l1, w_r1, b1]

    h_spec = pl.BlockSpec((tm, hp), lambda i: (i, 0))
    if project_before:
        in_specs_1.append(pl.BlockSpec((hp, op), lambda i: (0, 0)))   # W_l2
        args_1.append(w_l2)
        out_shape_1 = (jax.ShapeDtypeStruct((np_, hp), jnp.bfloat16),
                       jax.ShapeDtypeStruct((np_, op), jnp.bfloat16))
        out_specs_1 = (h_spec, pl.BlockSpec((tm, op), lambda i: (i, 0)))
    else:
        out_shape_1 = jax.ShapeDtypeStruct((np_, hp), jnp.bfloat16)
        out_specs_1 = h_spec

    flops1 = int(2 * np_ * np_ * fp + 4 * np_ * fp * hp
                 + (2 * np_ * hp * op if project_before else 0))
    bytes1 = int(np_ * np_ * 2 + np_ * fp * 2 + 4 * fp * hp + np_ * hp * 2
                 + np_ * 4 + hp * 4
                 + (2 * hp * op + np_ * op * 2 if project_before else 0))

    res1 = pl.pallas_call(
        kernel1,
        out_shape=out_shape_1,
        grid=grid,
        in_specs=in_specs_1,
        out_specs=out_specs_1,
        compiler_params=cparams,
        cost_estimate=pl.CostEstimate(flops=flops1, transcendentals=0,
                                      bytes_accessed=bytes1),
    )(*args_1)

    if project_before:
        h_p, m_full = res1
    else:
        h_p = res1
        m_full = h_p

    # ---------------- layer 2: A @ (h W_l2)  (or (A h) W_l2) + h W_r2 + b2 --
    kernel2 = functools.partial(_sage_layer2_kernel,
                                project_before=project_before)

    in_specs_2 = [
        cnt_spec,                                        # A counts row slab
        invdeg_spec,                                     # 1/deg rows
        pl.BlockSpec((np_, mdim), lambda i: (0, 0)),     # z or h, full resident
        pl.BlockSpec((tm, hp), lambda i: (i, 0)),        # h row tile (root)
    ]
    args_2 = [counts, inv_deg, m_full, h_p]
    if not project_before:
        in_specs_2.append(pl.BlockSpec((hp, op), lambda i: (0, 0)))   # W_l2
        args_2.append(w_l2)
    in_specs_2 += [pl.BlockSpec((hp, op), lambda i: (0, 0)),          # W_r2
                   pl.BlockSpec((1, op), lambda i: (0, 0))]           # b2
    args_2 += [w_r2, b2]

    flops2 = int(2 * np_ * np_ * mdim + 2 * np_ * hp * op
                 + (2 * np_ * hp * op if not project_before else 0))
    bytes2 = int(np_ * np_ * 2 + np_ * mdim * 2 + np_ * hp * 2
                 + 2 * hp * op * 2 + op * 4 + np_ * 4 + np_ * op * 4)

    out_p = pl.pallas_call(
        kernel2,
        out_shape=jax.ShapeDtypeStruct((np_, op), jnp.float32),
        grid=grid,
        in_specs=in_specs_2,
        out_specs=pl.BlockSpec((tm, op), lambda i: (i, 0)),
        compiler_params=cparams,
        cost_estimate=pl.CostEstimate(flops=flops2, transcendentals=0,
                                      bytes_accessed=bytes2),
    )(*args_2)

    return out_p[:n, :f_out]


def init_params(key, in_channels, hidden_channels, out_channels):
    ks = jax.random.split(key, 6)

    def glorot(k, shape):
        fan_in, fan_out = shape
        limit = (6.0 / (fan_in + fan_out)) ** 0.5
        return jax.random.uniform(k, shape, jnp.float32, -limit, limit)

    return {
        "w_l1": glorot(ks[0], (in_channels, hidden_channels)),
        "b_l1": jnp.zeros((hidden_channels,), jnp.float32),
        "w_r1": glorot(ks[1], (in_channels, hidden_channels)),
        "w_l2": glorot(ks[2], (hidden_channels, out_channels)),
        "b_l2": jnp.zeros((out_channels,), jnp.float32),
        "w_r2": glorot(ks[3], (hidden_channels, out_channels)),
    }


if __name__ == "__main__":
    key = jax.random.PRNGKey(0)
    k_x, k_e, k_p = jax.random.split(key, 3)

    num_nodes = 16
    in_channels, hidden_channels, out_channels = 8, 32, 16
    num_edges = 48

    x = jax.random.normal(k_x, (num_nodes, in_channels), jnp.float32)
    edge_index = jax.random.randint(k_e, (2, num_edges), 0, num_nodes, jnp.int32)

    params = init_params(k_p, in_channels, hidden_channels, out_channels)

    out = graphsage_forward(x, edge_index, params)   # eval mode (dropout = identity)
    out = jax.block_until_ready(out)
    assert out.shape == (num_nodes, out_channels)
    assert bool(jnp.all(jnp.isfinite(out)))
    print("KERNEL_OK")
</pallas_src>

<mosaic_0001>
module attributes {stable_mosaic.version = 11 : i64} {
  func.func @_sage_layer1_kernel(%arg0: i32, %arg1: memref<128x128xbf16, #tpu.memory_space<vmem>>, %arg2: memref<128x1xf32, #tpu.memory_space<vmem>>, %arg3: memref<128x128xbf16, #tpu.memory_space<vmem>>, %arg4: memref<128x128xbf16, #tpu.memory_space<vmem>>, %arg5: memref<128x128xbf16, #tpu.memory_space<vmem>>, %arg6: memref<128x128xbf16, #tpu.memory_space<vmem>>, %arg7: memref<1x128xf32, #tpu.memory_space<vmem>>, %arg8: memref<128x128xbf16, #tpu.memory_space<vmem>>, %arg9: memref<128x128xbf16, #tpu.memory_space<vmem>>, %arg10: memref<128x128xbf16, #tpu.memory_space<vmem>>) attributes {dimension_semantics = [#tpu.dimension_semantics<parallel>], iteration_bounds = array<i64: 1>, scalar_prefetch = 0 : i64, scratch_operands = 0 : i64, tpu.core_type = #tpu.core_type<tc>, window_params = [{transform_indices = @transform_0, window_bounds = array<i64: 128, 128>}, {transform_indices = @transform_1, window_bounds = array<i64: 128, 1>}, {pipeline_mode = #tpu.pipeline_mode<synchronous>, transform_indices = @transform_2, window_bounds = array<i64: 128, 128>}, {transform_indices = @transform_3, window_bounds = array<i64: 128, 128>}, {pipeline_mode = #tpu.pipeline_mode<synchronous>, transform_indices = @transform_4, window_bounds = array<i64: 128, 128>}, {pipeline_mode = #tpu.pipeline_mode<synchronous>, transform_indices = @transform_5, window_bounds = array<i64: 128, 128>}, {pipeline_mode = #tpu.pipeline_mode<synchronous>, transform_indices = @transform_6, window_bounds = array<i64: 1, 128>}, {pipeline_mode = #tpu.pipeline_mode<synchronous>, transform_indices = @transform_7, window_bounds = array<i64: 128, 128>}, {transform_indices = @transform_8, window_bounds = array<i64: 128, 128>}, {transform_indices = @transform_9, window_bounds = array<i64: 128, 128>}]} {
    %c0 = arith.constant 0 : index
    %c0_0 = arith.constant 0 : index
    %0 = vector.load %arg1[%c0, %c0_0] : memref<128x128xbf16, #tpu.memory_space<vmem>>, vector<128x128xbf16>
    %c0_1 = arith.constant 0 : index
    %c0_2 = arith.constant 0 : index
    %1 = vector.load %arg3[%c0_1, %c0_2] : memref<128x128xbf16, #tpu.memory_space<vmem>>, vector<128x128xbf16>
    %cst = arith.constant dense<0.000000e+00> : vector<128x128xf32>
    %2 = tpu.matmul %0, %1, %cst {dimension_numbers = #tpu.dot_dimension_numbers<[1], [0], [0], [1], [0, 0, 1, 1], [], []>} : vector<128x128xbf16>, vector<128x128xbf16>, vector<128x128xf32> -> vector<128x128xf32>
    %c0_3 = arith.constant 0 : index
    %c0_4 = arith.constant 0 : index
    %3 = vector.load %arg2[%c0_3, %c0_4] : memref<128x1xf32, #tpu.memory_space<vmem>>, vector<128x1xf32>
    %4 = vector.broadcast %3 : vector<128x1xf32> to vector<128x128xf32>
    %5 = arith.mulf %2, %4 : vector<128x128xf32>
    %6 = arith.truncf %5 : vector<128x128xf32> to vector<128x128xbf16>
    %c0_5 = arith.constant 0 : index
    %c0_6 = arith.constant 0 : index
    %7 = vector.load %arg5[%c0_5, %c0_6] : memref<128x128xbf16, #tpu.memory_space<vmem>>, vector<128x128xbf16>
    %cst_7 = arith.constant dense<0.000000e+00> : vector<128x128xf32>
    %8 = tpu.matmul %6, %7, %cst_7 {dimension_numbers = #tpu.dot_dimension_numbers<[1], [0], [0], [1], [0, 0, 1, 1], [], []>} : vector<128x128xbf16>, vector<128x128xbf16>, vector<128x128xf32> -> vector<128x128xf32>
    %c0_8 = arith.constant 0 : index
    %c0_9 = arith.constant 0 : index
    %9 = vector.load %arg4[%c0_8, %c0_9] : memref<128x128xbf16, #tpu.memory_space<vmem>>, vector<128x128xbf16>
    %c0_10 = arith.constant 0 : index
    %c0_11 = arith.constant 0 : index
    %10 = vector.load %arg6[%c0_10, %c0_11] : memref<128x128xbf16, #tpu.memory_space<vmem>>, vector<128x128xbf16>
    %cst_12 = arith.constant dense<0.000000e+00> : vector<128x128xf32>
    %11 = tpu.matmul %9, %10, %cst_12 {dimension_numbers = #tpu.dot_dimension_numbers<[1], [0], [0], [1], [0, 0, 1, 1], [], []>} : vector<128x128xbf16>, vector<128x128xbf16>, vector<128x128xf32> -> vector<128x128xf32>
    %12 = arith.addf %8, %11 : vector<128x128xf32>
    %c0_13 = arith.constant 0 : index
    %c0_14 = arith.constant 0 : index
    %13 = vector.load %arg7[%c0_13, %c0_14] : memref<1x128xf32, #tpu.memory_space<vmem>>, vector<1x128xf32>
    %14 = vector.broadcast %13 : vector<1x128xf32> to vector<128x128xf32>
    %15 = arith.addf %12, %14 : vector<128x128xf32>
    %cst_15 = arith.constant 0.000000e+00 : f32
    %16 = vector.broadcast %cst_15 : f32 to vector<128x128xf32>
    %17 = arith.maximumf %15, %16 : vector<128x128xf32>
    %18 = arith.truncf %17 : vector<128x128xf32> to vector<128x128xbf16>
    %c0_16 = arith.constant 0 : index
    %c0_17 = arith.constant 0 : index
    %19 = vector.load %arg9[%c0_16, %c0_17] : memref<128x128xbf16, #tpu.memory_space<vmem>>, vector<128x128xbf16>
    tpu.vector_store %arg9[%c0_16, %c0_17], %18 {strides = array<i32>} : memref<128x128xbf16, #tpu.memory_space<vmem>>, vector<128x128xbf16>,
    %c0_18 = arith.constant 0 : index
    %c0_19 = arith.constant 0 : index
    %20 = vector.load %arg8[%c0_18, %c0_19] : memref<128x128xbf16, #tpu.memory_space<vmem>>, vector<128x128xbf16>
    %cst_20 = arith.constant dense<0.000000e+00> : vector<128x128xf32>
    %21 = tpu.matmul %18, %20, %cst_20 {dimension_numbers = #tpu.dot_dimension_numbers<[1], [0], [0], [1], [0, 0, 1, 1], [], []>} : vector<128x128xbf16>, vector<128x128xbf16>, vector<128x128xf32> -> vector<128x128xf32>
    %22 = arith.truncf %21 : vector<128x128xf32> to vector<128x128xbf16>
    %c0_21 = arith.constant 0 : index
    %c0_22 = arith.constant 0 : index
    %23 = vector.load %arg10[%c0_21, %c0_22] : memref<128x128xbf16, #tpu.memory_space<vmem>>, vector<128x128xbf16>
    tpu.vector_store %arg10[%c0_21, %c0_22], %22 {strides = array<i32>} : memref<128x128xbf16, #tpu.memory_space<vmem>>, vector<128x128xbf16>,
    return
  }
  func.func @transform_0(%arg0: i32) -> (i32, i32) {
    %c0_i32 = arith.constant 0 : i32
    %c0_i32_0 = arith.constant 0 : i32
    return %arg0, %c0_i32 : i32, i32
  }
  func.func @transform_1(%arg0: i32) -> (i32, i32) {
    %c0_i32 = arith.constant 0 : i32
    %c0_i32_0 = arith.constant 0 : i32
    return %arg0, %c0_i32 : i32, i32
  }
  func.func @transform_2(%arg0: i32) -> (i32, i32) {
    %c0_i32 = arith.constant 0 : i32
    %c0_i32_0 = arith.constant 0 : i32
    %c0_i32_1 = arith.constant 0 : i32
    return %c0_i32, %c0_i32_0 : i32, i32
  }
  func.func @transform_3(%arg0: i32) -> (i32, i32) {
    %c0_i32 = arith.constant 0 : i32
    %c0_i32_0 = arith.constant 0 : i32
    return %arg0, %c0_i32 : i32, i32
  }
  func.func @transform_4(%arg0: i32) -> (i32, i32) {
    %c0_i32 = arith.constant 0 : i32
    %c0_i32_0 = arith.constant 0 : i32
    %c0_i32_1 = arith.constant 0 : i32
    return %c0_i32, %c0_i32_0 : i32, i32
  }
  func.func @transform_5(%arg0: i32) -> (i32, i32) {
    %c0_i32 = arith.constant 0 : i32
    %c0_i32_0 = arith.constant 0 : i32
    %c0_i32_1 = arith.constant 0 : i32
    return %c0_i32, %c0_i32_0 : i32, i32
  }
  func.func @transform_6(%arg0: i32) -> (i32, i32) {
    %c0_i32 = arith.constant 0 : i32
    %c0_i32_0 = arith.constant 0 : i32
    %c0_i32_1 = arith.constant 0 : i32
    return %c0_i32, %c0_i32_0 : i32, i32
  }
  func.func @transform_7(%arg0: i32) -> (i32, i32) {
    %c0_i32 = arith.constant 0 : i32
    %c0_i32_0 = arith.constant 0 : i32
    %c0_i32_1 = arith.constant 0 : i32
    return %c0_i32, %c0_i32_0 : i32, i32
  }
  func.func @transform_8(%arg0: i32) -> (i32, i32) {
    %c0_i32 = arith.constant 0 : i32
    %c0_i32_0 = arith.constant 0 : i32
    return %arg0, %c0_i32 : i32, i32
  }
  func.func @transform_9(%arg0: i32) -> (i32, i32) {
    %c0_i32 = arith.constant 0 : i32
    %c0_i32_0 = arith.constant 0 : i32
    return %arg0, %c0_i32 : i32, i32
  }
}

</mosaic_0001>

<llo_original>
// kernel: tpu_custom_call.1
$region0: #{tpu_custom_call.1}
  #allocation0 [shape = 'u32[]', space=smem, size = 0x4, offset = 0x4, fixed_abs, tag = 'smem constant byte address 0x4 - core index']
  #allocation1 [shape = 'u32[144,128]{1,0:T(1,128)}', space=vmem, size = 0x12000, scoped, tag = 'internal scratch']
  %s0 = inlined_call_operand.vmem [shape: bf16[128,128], index: 0, kind: input, shape index: {}]
  %s1 = inlined_call_operand.vmem [shape: f32[128,1], index: 1, kind: input, shape index: {}]
  %s2 = inlined_call_operand.vmem [shape: bf16[128,128], index: 2, kind: input, shape index: {}]
  %s3 = inlined_call_operand.hbm [shape: bf16[128,128], index: 3, kind: input, shape index: {}]
  %s4 = inlined_call_operand.hbm [shape: bf16[128,128], index: 4, kind: input, shape index: {}]
  %s5 = inlined_call_operand.hbm [shape: bf16[128,128], index: 5, kind: input, shape index: {}]
  %s6 = inlined_call_operand.vmem [shape: f32[1,128], index: 6, kind: input, shape index: {}]
  %s7 = inlined_call_operand.hbm [shape: bf16[128,128], index: 7, kind: input, shape index: {}]
  %s8 = inlined_call_operand.hbm [shape: bf16[128,128], index: 8, kind: output, shape index: {0}]
  %s9 = inlined_call_operand.hbm [shape: bf16[128,128], index: 9, kind: output, shape index: {1}]
  %10 = xla_tuple %s8, %s9
  %s11 = sld [smem:[#allocation0]]
  $region66: #{tpu_custom_call.1} parent=0
    _
  %s13 = ssub.s32 1, %s11
  %s14 = scalar_select 0, %s13, %s11
  $region1: #{tpu_custom_call.1} parent=0
    #allocation2 [shape = 'u8[32768]{0}', space=vmem, size = 0x8000, scoped, tag = 'input window, operand 3, single buffered']
    #allocation3 [shape = 's32[1]{0}', space=sflag, size = 0x4, scoped, tag = 'scoped memory for tpu_custom_call.1']
    #allocation4 [shape = 's32[1]{0}', space=sflag, size = 0x4, scoped, tag = 'scoped memory for tpu_custom_call.1']
    #allocation5 [shape = 'u8[32768]{0}', space=vmem, size = 0x8000, scoped, tag = 'input window, operand 4, single buffered']
    #allocation6 [shape = 's32[1]{0}', space=sflag, size = 0x4, scoped, tag = 'scoped memory for tpu_custom_call.1']
    #allocation7 [shape = 'u8[32768]{0}', space=vmem, size = 0x8000, scoped, tag = 'input window, operand 5, single buffered']
    #allocation8 [shape = 'u8[32768]{0}', space=vmem, size = 0x8000, scoped, tag = 'input window, operand 7, single buffered']
    #allocation9 [shape = 's32[1]{0}', space=sflag, size = 0x4, scoped, tag = 'scoped memory for tpu_custom_call.1']
    #allocation10 [shape = 'u8[32768]{0}', space=vmem, size = 0x8000, scoped, tag = 'output window, operand 0, single buffered']
    #allocation11 [shape = 'u8[32768]{0}', space=vmem, size = 0x8000, scoped, tag = 'output window, operand 1, single buffered']
    #allocation12 [shape = 's32[1]{0}', space=sflag, size = 0x4, scoped, tag = 'scoped memory for tpu_custom_call.1']
    %15 = vsyncpa [#allocation3], 0
    %16 = vsyncpa [#allocation6], 0
    %17 = vsyncpa [#allocation9], 0
    %18 = vsyncpa [#allocation4], 0
    %19 = vsyncpa [#allocation12], 0
    // Predicated region
    $region2: #{tpu_custom_call.1} parent=1 // pred_check
      _
    $region3: #{tpu_custom_call.1} parent=1 // pred_check_branch
      %21 = sbr.rel (0) target = $region5
    $region4: #{tpu_custom_call.1} parent=1 // pred_region
      _
    $region5: #{tpu_custom_call.1} parent=1 // pred_fallthru
      _
    // Predicated region
    $region6: #{tpu_custom_call.1} parent=1 // pred_check
      _
    $region7: #{tpu_custom_call.1} parent=1 // pred_check_branch
      %23 = sbr.rel (0) target = $region9
    $region8: #{tpu_custom_call.1} parent=1 // pred_region
      _
    $region9: #{tpu_custom_call.1} parent=1 // pred_fallthru
      _
    // Predicated region
    $region10: #{tpu_custom_call.1} parent=1 // pred_check
      _
    $region11: #{tpu_custom_call.1} parent=1 // pred_check_branch
      %25 = sbr.rel (0) target = $region13
    $region12: #{tpu_custom_call.1} parent=1 // pred_region
      _
    $region13: #{tpu_custom_call.1} parent=1 // pred_fallthru
      _
    // Predicated region
    $region14: #{tpu_custom_call.1} parent=1 // pred_check
      _
    $region15: #{tpu_custom_call.1} parent=1 // pred_check_branch
      %27 = sbr.rel (0) target = $region17
    $region16: #{tpu_custom_call.1} parent=1 // pred_region
      %s29 = ssub.s32 1024, 1024
      %30 = vsyncadd [#allocation3], %s29
      %s31 = sshll.u32 [#allocation2], 4
      %s32 = int_to_ptr.vmem [resolvable:$true] %s31
      %37 = dma.hbm_to_vmem [thread:$0]  %s3, 1024, %s32, [#allocation3], 64, 64, 4
    $region17: #{tpu_custom_call.1} parent=1 // pred_fallthru
      _
    // Predicated region
    $region18: #{tpu_custom_call.1} parent=1 // pred_check
      _
    $region19: #{tpu_custom_call.1} parent=1 // pred_check_branch
      %39 = sbr.rel (0) target = $region21
    $region20: #{tpu_custom_call.1} parent=1 // pred_region
      %s41 = ssub.s32 1024, 1024
      %42 = vsyncadd [#allocation6], %s41
      %s43 = sshll.u32 [#allocation5], 4
      %s44 = int_to_ptr.vmem [resolvable:$true] %s43
      %49 = dma.hbm_to_vmem [thread:$0]  %s4, 1024, %s44, [#allocation6], 64, 64, 4
    $region21: #{tpu_custom_call.1} parent=1 // pred_fallthru
      _
    // Predicated region
    $region22: #{tpu_custom_call.1} parent=1 // pred_check
      _
    $region23: #{tpu_custom_call.1} parent=1 // pred_check_branch
      %51 = sbr.rel (0) target = $region25
    $region24: #{tpu_custom_call.1} parent=1 // pred_region
      %s53 = ssub.s32 1024, 1024
      %54 = vsyncadd [#allocation6], %s53
      %s55 = sshll.u32 [#allocation7], 4
      %s56 = int_to_ptr.vmem [resolvable:$true] %s55
      %61 = dma.hbm_to_vmem [thread:$0]  %s5, 1024, %s56, [#allocation6], 64, 64, 4
    $region25: #{tpu_custom_call.1} parent=1 // pred_fallthru
      _
    // Predicated region
    $region26: #{tpu_custom_call.1} parent=1 // pred_check
      _
    $region27: #{tpu_custom_call.1} parent=1 // pred_check_branch
      %63 = sbr.rel (0) target = $region29
    $region28: #{tpu_custom_call.1} parent=1 // pred_region
      _
    $region29: #{tpu_custom_call.1} parent=1 // pred_fallthru
      _
    // Predicated region
    $region30: #{tpu_custom_call.1} parent=1 // pred_check
      _
    $region31: #{tpu_custom_call.1} parent=1 // pred_check_branch
      %65 = sbr.rel (0) target = $region33
    $region32: #{tpu_custom_call.1} parent=1 // pred_region
      %s67 = ssub.s32 1024, 1024
      %68 = vsyncadd [#allocation9], %s67
      %s69 = sshll.u32 [#allocation8], 4
      %s70 = int_to_ptr.vmem [resolvable:$true] %s69
      %75 = dma.hbm_to_vmem [thread:$0]  %s7, 1024, %s70, [#allocation9], 64, 64, 4
    $region33: #{tpu_custom_call.1} parent=1 // pred_fallthru
      _
    // Predicated region
    $region34: #{tpu_custom_call.1} parent=1 // pred_check
      _
    $region35: #{tpu_custom_call.1} parent=1 // pred_check_branch
      %77 = sbr.rel (0) target = $region37
    $region36: #{tpu_custom_call.1} parent=1 // pred_region
      %78 = dma.done [#allocation3], 1024
    $region37: #{tpu_custom_call.1} parent=1 // pred_fallthru
      _
    // Predicated region
    $region38: #{tpu_custom_call.1} parent=1 // pred_check
      _
    $region39: #{tpu_custom_call.1} parent=1 // pred_check_branch
      %80 = sbr.rel (0) target = $region41
    $region40: #{tpu_custom_call.1} parent=1 // pred_region
      %81 = dma.done [#allocation6], 1024
    $region41: #{tpu_custom_call.1} parent=1 // pred_fallthru
      _
    // Predicated region
    $region42: #{tpu_custom_call.1} parent=1 // pred_check
      _
    $region43: #{tpu_custom_call.1} parent=1 // pred_check_branch
      %83 = sbr.rel (0) target = $region45
    $region44: #{tpu_custom_call.1} parent=1 // pred_region
      %84 = dma.done [#allocation6], 1024
    $region45: #{tpu_custom_call.1} parent=1 // pred_fallthru
      _
    // Predicated region
    $region46: #{tpu_custom_call.1} parent=1 // pred_check
      _
    $region47: #{tpu_custom_call.1} parent=1 // pred_check_branch
      %86 = sbr.rel (0) target = $region49
    $region48: #{tpu_custom_call.1} parent=1 // pred_region
      %87 = dma.done [#allocation9], 1024
    $region49: #{tpu_custom_call.1} parent=1 // pred_fallthru
      _
    %v89 = vld [vmem:[%s0] sm:$0xf]
    %v90 = vld [vmem:[%s0 + $0x4] sm:$0xf]
    %v91 = vld [vmem:[%s0 + $0x8] sm:$0xf]
    %v92 = vld [vmem:[%s0 + $0xc] sm:$0xf]
    %v93 = vld [vmem:[%s0 + $0x10] sm:$0xf]
    %v94 = vld [vmem:[%s0 + $0x14] sm:$0xf]
    %v95 = vld [vmem:[%s0 + $0x18] sm:$0xf]
    %v96 = vld [vmem:[%s0 + $0x1c] sm:$0xf]
    %v97 = vld [vmem:[%s0 + $0x20] sm:$0xf]
    %v98 = vld [vmem:[%s0 + $0x24] sm:$0xf]
    %v99 = vld [vmem:[%s0 + $0x28] sm:$0xf]
    %v100 = vld [vmem:[%s0 + $0x2c] sm:$0xf]
    %v101 = vld [vmem:[%s0 + $0x30] sm:$0xf]
    %v102 = vld [vmem:[%s0 + $0x34] sm:$0xf]
    %v103 = vld [vmem:[%s0 + $0x38] sm:$0xf]
    %v104 = vld [vmem:[%s0 + $0x3c] sm:$0xf]
    %v105 = vld [vmem:[%s2] sm:$0xf]
    %v106 = vld [vmem:[%s2 + $0x4] sm:$0xf]
    %v107 = vld [vmem:[%s2 + $0x8] sm:$0xf]
    %v108 = vld [vmem:[%s2 + $0xc] sm:$0xf]
    %v109 = vld [vmem:[%s2 + $0x10] sm:$0xf]
    %v110 = vld [vmem:[%s2 + $0x14] sm:$0xf]
    %v111 = vld [vmem:[%s2 + $0x18] sm:$0xf]
    %v112 = vld [vmem:[%s2 + $0x1c] sm:$0xf]
    %v113 = vld [vmem:[%s2 + $0x20] sm:$0xf]
    %v114 = vld [vmem:[%s2 + $0x24] sm:$0xf]
    %v115 = vld [vmem:[%s2 + $0x28] sm:$0xf]
    %v116 = vld [vmem:[%s2 + $0x2c] sm:$0xf]
    %v117 = vld [vmem:[%s2 + $0x30] sm:$0xf]
    %v118 = vld [vmem:[%s2 + $0x34] sm:$0xf]
    %v119 = vld [vmem:[%s2 + $0x38] sm:$0xf]
    %v120 = vld [vmem:[%s2 + $0x3c] sm:$0xf]
    %v137 = vunpack.c.l.b16 %v89
    %v138 = vunpack.c.l.b16 %v90
    %v139 = vunpack.c.l.b16 %v91
    %v140 = vunpack.c.l.b16 %v92
    %v141 = vunpack.c.l.b16 %v93
    %v142 = vunpack.c.l.b16 %v94
    %v143 = vunpack.c.l.b16 %v95
    %v144 = vunpack.c.l.b16 %v96
    %v145 = vunpack.c.l.b16 %v97
    %v146 = vunpack.c.l.b16 %v98
    %v147 = vunpack.c.l.b16 %v99
    %v148 = vunpack.c.l.b16 %v100
    %v149 = vunpack.c.l.b16 %v101
    %v150 = vunpack.c.l.b16 %v102
    %v151 = vunpack.c.l.b16 %v103
    %v152 = vunpack.c.l.b16 %v104
    %v153 = vpack.c.b16 %v138, %v137
    %v154 = vpack.c.b16 %v140, %v139
    %v155 = vpack.c.b16 %v142, %v141
    %v156 = vpack.c.b16 %v144, %v143
    %v157 = vpack.c.b16 %v146, %v145
    %v158 = vpack.c.b16 %v148, %v147
    %v159 = vpack.c.b16 %v150, %v149
    %v160 = vpack.c.b16 %v152, %v151
    %v185 = vunpack.c.l.b16 %v105
    %v186 = vunpack.c.l.b16 %v106
    %v187 = vunpack.c.l.b16 %v107
    %v188 = vunpack.c.l.b16 %v108
    %v189 = vunpack.c.l.b16 %v109
    %v190 = vunpack.c.l.b16 %v110
    %v191 = vunpack.c.l.b16 %v111
    %v192 = vunpack.c.l.b16 %v112
    %v193 = vunpack.c.l.b16 %v113
    %v194 = vunpack.c.l.b16 %v114
    %v195 = vunpack.c.l.b16 %v115
    %v196 = vunpack.c.l.b16 %v116
    %v197 = vunpack.c.l.b16 %v117
    %v198 = vunpack.c.l.b16 %v118
    %v199 = vunpack.c.l.b16 %v119
    %v200 = vunpack.c.l.b16 %v120
    %v201 = vpack.c.b16 %v186, %v185
    %v202 = vpack.c.b16 %v188, %v187
    %v203 = vpack.c.b16 %v190, %v189
    %v204 = vpack.c.b16 %v192, %v191
    %v205 = vpack.c.b16 %v194, %v193
    %v206 = vpack.c.b16 %v196, %v195
    %v207 = vpack.c.b16 %v198, %v197
    %v208 = vpack.c.b16 %v200, %v199
    %217 = vmatprep.subr.bf16.mxu0 0
    %218 = vmatpush1.bf16.msra.mxu0 %v208
    %219 = vmatprep.subr.bf16.mxu0 0
    %220 = vmatpush1.bf16.msra.mxu0 %v207
    %221 = vmatprep.subr.bf16.mxu0 0
    %222 = vmatpush1.bf16.msra.mxu0 %v206
    %223 = vmatprep.subr.bf16.mxu0 0
    %224 = vmatpush1.bf16.msra.mxu0 %v205
    %225 = vmatprep.subr.bf16.mxu0 0
    %226 = vmatpush1.bf16.msra.mxu0 %v204
    %227 = vmatprep.subr.bf16.mxu0 0
    %228 = vmatpush1.bf16.msra.mxu0 %v203
    %229 = vmatprep.subr.bf16.mxu0 0
    %230 = vmatpush1.bf16.msra.mxu0 %v202
    %231 = vmatprep.subr.bf16.mxu0 0
    %232 = vmatpush1.bf16.msra.mxu0 %v201
    %233 = vmatprep.subr.bf16.mxu0 0
    %234 = vmatpush2.bf16.msra.mxu0 0
    %235 = vmatprep.subr.bf16.mxu0 0
    %236 = vmatpush2.bf16.msra.mxu0 0
    %237 = vmatprep.subr.bf16.mxu0 0
    %238 = vmatpush2.bf16.msra.mxu0 0
    %239 = vmatprep.subr.bf16.mxu0 0
    %240 = vmatpush2.bf16.msra.mxu0 0
    %241 = vmatprep.subr.bf16.mxu0 0
    %242 = vmatpush2.bf16.msra.mxu0 0
    %243 = vmatprep.subr.bf16.mxu0 0
    %244 = vmatpush2.bf16.msra.mxu0 0
    %245 = vmatprep.subr.bf16.mxu0 0
    %246 = vmatpush2.bf16.msra.mxu0 0
    %247 = vmatprep.subr.bf16.mxu0 0
    %248 = vmatpush2.bf16.msra.mxu0 0
    %249 = vmatprep.mubr.bf16.mxu0 0
    %250 = vmatmul.mubr.bf16.gmra.mxu0 %v153
    %v251 = vpop.f32.mrf.mxu0
    %v252 = vadd.f32 0.0, %v251
    %v253 = vpop.f32.mrf.mxu0
    %v254 = vpop.f32.mrf.mxu0
    %v255 = vadd.f32 0.0, %v254
    %v256 = vpop.f32.mrf.mxu0
    %257 = vmatprep.mubr.bf16.mxu0 0
    %258 = vmatmul.mubr.bf16.gmra.mxu0 %v154
    %v259 = vpop.f32.mrf.mxu0
    %v260 = vadd.f32 0.0, %v259
    %v261 = vpop.f32.mrf.mxu0
    %v262 = vpop.f32.mrf.mxu0
    %v263 = vadd.f32 0.0, %v262
    %v264 = vpop.f32.mrf.mxu0
    %265 = vmatprep.mubr.bf16.mxu0 0
    %266 = vmatmul.mubr.bf16.gmra.mxu0 %v155
    %v267 = vpop.f32.mrf.mxu0
    %v268 = vadd.f32 0.0, %v267
    %v269 = vpop.f32.mrf.mxu0
    %v270 = vpop.f32.mrf.mxu0
    %v271 = vadd.f32 0.0, %v270
    %v272 = vpop.f32.mrf.mxu0
    %273 = vmatprep.mubr.bf16.mxu0 0
    %274 = vmatmul.mubr.bf16.gmra.mxu0 %v156
    %v275 = vpop.f32.mrf.mxu0
    %v276 = vadd.f32 0.0, %v275
    %v277 = vpop.f32.mrf.mxu0
    %v278 = vpop.f32.mrf.mxu0
    %v279 = vadd.f32 0.0, %v278
    %v280 = vpop.f32.mrf.mxu0
    %281 = vmatprep.mubr.bf16.mxu0 0
    %282 = vmatmul.mubr.bf16.gmra.mxu0 %v157
    %v283 = vpop.f32.mrf.mxu0
    %v284 = vadd.f32 0.0, %v283
    %v285 = vpop.f32.mrf.mxu0
    %v286 = vpop.f32.mrf.mxu0
    %v287 = vadd.f32 0.0, %v286
    %v288 = vpop.f32.mrf.mxu0
    %289 = vmatprep.mubr.bf16.mxu0 0
    %290 = vmatmul.mubr.bf16.gmra.mxu0 %v158
    %v291 = vpop.f32.mrf.mxu0
    %v292 = vadd.f32 0.0, %v291
    %v293 = vpop.f32.mrf.mxu0
    %v294 = vpop.f32.mrf.mxu0
    %v295 = vadd.f32 0.0, %v294
    %v296 = vpop.f32.mrf.mxu0
    %297 = vmatprep.mubr.bf16.mxu0 0
    %298 = vmatmul.mubr.bf16.gmra.mxu0 %v159
    %v299 = vpop.f32.mrf.mxu0
    %v300 = vadd.f32 0.0, %v299
    %v301 = vpop.f32.mrf.mxu0
    %v302 = vpop.f32.mrf.mxu0
    %v303 = vadd.f32 0.0, %v302
    %v304 = vpop.f32.mrf.mxu0
    %305 = vmatprep.mubr.bf16.mxu0 0
    %306 = vmatmul.mubr.bf16.gmra.mxu0 %v160
    %v307 = vpop.f32.mrf.mxu0
    %v308 = vadd.f32 0.0, %v307
    %v309 = vpop.f32.mrf.mxu0
    %v310 = vpop.f32.mrf.mxu0
    %v311 = vadd.f32 0.0, %v310
    %v312 = vpop.f32.mrf.mxu0
    %313 = vdwg.mxu0
    %v314 = vld [vmem:[%s1] sm:$0xff]
    %v315 = vld [vmem:[%s1 + $0x8] sm:$0xff]
    %v316 = vld [vmem:[%s1 + $0x10] sm:$0xff]
    %v317 = vld [vmem:[%s1 + $0x18] sm:$0xff]
    %v318 = vld [vmem:[%s1 + $0x20] sm:$0xff]
    %v319 = vld [vmem:[%s1 + $0x28] sm:$0xff]
    %v320 = vld [vmem:[%s1 + $0x30] sm:$0xff]
    %v321 = vld [vmem:[%s1 + $0x38] sm:$0xff]
    %v322 = vld [vmem:[%s1 + $0x40] sm:$0xff]
    %v323 = vld [vmem:[%s1 + $0x48] sm:$0xff]
    %v324 = vld [vmem:[%s1 + $0x50] sm:$0xff]
    %v325 = vld [vmem:[%s1 + $0x58] sm:$0xff]
    %v326 = vld [vmem:[%s1 + $0x60] sm:$0xff]
    %v327 = vld [vmem:[%s1 + $0x68] sm:$0xff]
    %v328 = vld [vmem:[%s1 + $0x70] sm:$0xff]
    %v329 = vld [vmem:[%s1 + $0x78] sm:$0xff]
    %331 = vset.pattern.permute.xlu0 0
    %332 = vperm.xlu0 %331, %v314
    %v333 = vpop.permute.xlu0 %332
    %336 = vset.pattern.permute.xlu0 0
    %337 = vperm.xlu0 %336, %v315
    %v338 = vpop.permute.xlu0 %337
    %341 = vset.pattern.permute.xlu0 0
    %342 = vperm.xlu0 %341, %v316
    %v343 = vpop.permute.xlu0 %342
    %346 = vset.pattern.permute.xlu0 0
    %347 = vperm.xlu0 %346, %v317
    %v348 = vpop.permute.xlu0 %347
    %351 = vset.pattern.permute.xlu0 0
    %352 = vperm.xlu0 %351, %v318
    %v353 = vpop.permute.xlu0 %352
    %356 = vset.pattern.permute.xlu0 0
    %357 = vperm.xlu0 %356, %v319
    %v358 = vpop.permute.xlu0 %357
    %361 = vset.pattern.permute.xlu0 0
    %362 = vperm.xlu0 %361, %v320
    %v363 = vpop.permute.xlu0 %362
    %366 = vset.pattern.permute.xlu0 0
    %367 = vperm.xlu0 %366, %v321
    %v368 = vpop.permute.xlu0 %367
    %371 = vset.pattern.permute.xlu0 0
    %372 = vperm.xlu0 %371, %v322
    %v373 = vpop.permute.xlu0 %372
    %376 = vset.pattern.permute.xlu0 0
    %377 = vperm.xlu0 %376, %v323
    %v378 = vpop.permute.xlu0 %377
    %381 = vset.pattern.permute.xlu0 0
    %382 = vperm.xlu0 %381, %v324
    %v383 = vpop.permute.xlu0 %382
    %386 = vset.pattern.permute.xlu0 0
    %387 = vperm.xlu0 %386, %v325
    %v388 = vpop.permute.xlu0 %387
    %391 = vset.pattern.permute.xlu0 0
    %392 = vperm.xlu0 %391, %v326
    %v393 = vpop.permute.xlu0 %392
    %396 = vset.pattern.permute.xlu0 0
    %397 = vperm.xlu0 %396, %v327
    %v398 = vpop.permute.xlu0 %397
    %401 = vset.pattern.permute.xlu0 0
    %402 = vperm.xlu0 %401, %v328
    %v403 = vpop.permute.xlu0 %402
    %406 = vset.pattern.permute.xlu0 0
    %407 = vperm.xlu0 %406, %v329
    %v408 = vpop.permute.xlu0 %407
    %v410 = vmul.f32 %v252, %v333
    %v411 = vmul.f32 %v255, %v338
    %v412 = vmul.f32 %v260, %v343
    %v413 = vmul.f32 %v263, %v348
    %v414 = vmul.f32 %v268, %v353
    %v415 = vmul.f32 %v271, %v358
    %v416 = vmul.f32 %v276, %v363
    %v417 = vmul.f32 %v279, %v368
    %v418 = vmul.f32 %v284, %v373
    %v419 = vmul.f32 %v287, %v378
    %v420 = vmul.f32 %v292, %v383
    %v421 = vmul.f32 %v295, %v388
    %v422 = vmul.f32 %v300, %v393
    %v423 = vmul.f32 %v303, %v398
    %v424 = vmul.f32 %v308, %v403
    %v425 = vmul.f32 %v311, %v408
    %v426 = vpack.c.bf16 %v411, %v410
    %v427 = vpack.c.bf16 %v413, %v412
    %v428 = vpack.c.bf16 %v415, %v414
    %v429 = vpack.c.bf16 %v417, %v416
    %v430 = vpack.c.bf16 %v419, %v418
    %v431 = vpack.c.bf16 %v421, %v420
    %v432 = vpack.c.bf16 %v423, %v422
    %v433 = vpack.c.bf16 %v425, %v424
    %v434 = vld [vmem:[#allocation5] sm:$0xf]
    %v435 = vld [vmem:[#allocation5 + $0x4] sm:$0xf]
    %v436 = vld [vmem:[#allocation5 + $0x8] sm:$0xf]
    %v437 = vld [vmem:[#allocation5 + $0xc] sm:$0xf]
    %v438 = vld [vmem:[#allocation5 + $0x10] sm:$0xf]
    %v439 = vld [vmem:[#allocation5 + $0x14] sm:$0xf]
    %v440 = vld [vmem:[#allocation5 + $0x18] sm:$0xf]
    %v441 = vld [vmem:[#allocation5 + $0x1c] sm:$0xf]
    %v442 = vld [vmem:[#allocation5 + $0x20] sm:$0xf]
    %v443 = vld [vmem:[#allocation5 + $0x24] sm:$0xf]
    %v444 = vld [vmem:[#allocation5 + $0x28] sm:$0xf]
    %v445 = vld [vmem:[#allocation5 + $0x2c] sm:$0xf]
    %v446 = vld [vmem:[#allocation5 + $0x30] sm:$0xf]
    %v447 = vld [vmem:[#allocation5 + $0x34] sm:$0xf]
    %v448 = vld [vmem:[#allocation5 + $0x38] sm:$0xf]
    %v449 = vld [vmem:[#allocation5 + $0x3c] sm:$0xf]
    %v450 = vld [vmem:[#allocation2] sm:$0xf]
    %v451 = vld [vmem:[#allocation2 + $0x4] sm:$0xf]
    %v452 = vld [vmem:[#allocation2 + $0x8] sm:$0xf]
    %v453 = vld [vmem:[#allocation2 + $0xc] sm:$0xf]
    %v454 = vld [vmem:[#allocation2 + $0x10] sm:$0xf]
    %v455 = vld [vmem:[#allocation2 + $0x14] sm:$0xf]
    %v456 = vld [vmem:[#allocation2 + $0x18] sm:$0xf]
    %v457 = vld [vmem:[#allocation2 + $0x1c] sm:$0xf]
    %v458 = vld [vmem:[#allocation2 + $0x20] sm:$0xf]
    %v459 = vld [vmem:[#allocation2 + $0x24] sm:$0xf]
    %v460 = vld [vmem:[#allocation2 + $0x28] sm:$0xf]
    %v461 = vld [vmem:[#allocation2 + $0x2c] sm:$0xf]
    %v462 = vld [vmem:[#allocation2 + $0x30] sm:$0xf]
    %v463 = vld [vmem:[#allocation2 + $0x34] sm:$0xf]
    %v464 = vld [vmem:[#allocation2 + $0x38] sm:$0xf]
    %v465 = vld [vmem:[#allocation2 + $0x3c] sm:$0xf]
    %v466 = vld [vmem:[#allocation7] sm:$0xf]
    %v467 = vld [vmem:[#allocation7 + $0x4] sm:$0xf]
    %v468 = vld [vmem:[#allocation7 + $0x8] sm:$0xf]
    %v469 = vld [vmem:[#allocation7 + $0xc] sm:$0xf]
    %v470 = vld [vmem:[#allocation7 + $0x10] sm:$0xf]
    %v471 = vld [vmem:[#allocation7 + $0x14] sm:$0xf]
    %v472 = vld [vmem:[#allocation7 + $0x18] sm:$0xf]
    %v473 = vld [vmem:[#allocation7 + $0x1c] sm:$0xf]
    %v474 = vld [vmem:[#allocation7 + $0x20] sm:$0xf]
    %v475 = vld [vmem:[#allocation7 + $0x24] sm:$0xf]
    %v476 = vld [vmem:[#allocation7 + $0x28] sm:$0xf]
    %v477 = vld [vmem:[#allocation7 + $0x2c] sm:$0xf]
    %v478 = vld [vmem:[#allocation7 + $0x30] sm:$0xf]
    %v479 = vld [vmem:[#allocation7 + $0x34] sm:$0xf]
    %v480 = vld [vmem:[#allocation7 + $0x38] sm:$0xf]
    %v481 = vld [vmem:[#allocation7 + $0x3c] sm:$0xf]
    %v498 = vunpack.c.l.b16 %v450
    %v499 = vunpack.c.l.b16 %v451
    %v500 = vunpack.c.l.b16 %v452
    %v501 = vunpack.c.l.b16 %v453
    %v502 = vunpack.c.l.b16 %v454
    %v503 = vunpack.c.l.b16 %v455
    %v504 = vunpack.c.l.b16 %v456
    %v505 = vunpack.c.l.b16 %v457
    %v506 = vunpack.c.l.b16 %v458
    %v507 = vunpack.c.l.b16 %v459
    %v508 = vunpack.c.l.b16 %v460
    %v509 = vunpack.c.l.b16 %v461
    %v510 = vunpack.c.l.b16 %v462
    %v511 = vunpack.c.l.b16 %v463
    %v512 = vunpack.c.l.b16 %v464
    %v513 = vunpack.c.l.b16 %v465
    %v514 = vpack.c.b16 %v499, %v498
    %v515 = vpack.c.b16 %v501, %v500
    %v516 = vpack.c.b16 %v503, %v502
    %v517 = vpack.c.b16 %v505, %v504
    %v518 = vpack.c.b16 %v507, %v506
    %v519 = vpack.c.b16 %v509, %v508
    %v520 = vpack.c.b16 %v511, %v510
    %v521 = vpack.c.b16 %v513, %v512
    %v546 = vunpack.c.l.b16 %v466
    %v547 = vunpack.c.l.b16 %v467
    %v548 = vunpack.c.l.b16 %v468
    %v549 = vunpack.c.l.b16 %v469
    %v550 = vunpack.c.l.b16 %v470
    %v551 = vunpack.c.l.b16 %v471
    %v552 = vunpack.c.l.b16 %v472
    %v553 = vunpack.c.l.b16 %v473
    %v554 = vunpack.c.l.b16 %v474
    %v555 = vunpack.c.l.b16 %v475
    %v556 = vunpack.c.l.b16 %v476
    %v557 = vunpack.c.l.b16 %v477
    %v558 = vunpack.c.l.b16 %v478
    %v559 = vunpack.c.l.b16 %v479
    %v560 = vunpack.c.l.b16 %v480
    %v561 = vunpack.c.l.b16 %v481
    %v562 = vpack.c.b16 %v547, %v546
    %v563 = vpack.c.b16 %v549, %v548
    %v564 = vpack.c.b16 %v551, %v550
    %v565 = vpack.c.b16 %v553, %v552
    %v566 = vpack.c.b16 %v555, %v554
    %v567 = vpack.c.b16 %v557, %v556
    %v568 = vpack.c.b16 %v559, %v558
    %v569 = vpack.c.b16 %v561, %v560
    %578 = vmatprep.subr.bf16.mxu0 0
    %579 = vmatpush1.bf16.msra.mxu0 %v569
    %580 = vmatprep.subr.bf16.mxu0 0
    %581 = vmatpush1.bf16.msra.mxu0 %v568
    %582 = vmatprep.subr.bf16.mxu0 0
    %583 = vmatpush1.bf16.msra.mxu0 %v567
    %584 = vmatprep.subr.bf16.mxu0 0
    %585 = vmatpush1.bf16.msra.mxu0 %v566
    %586 = vmatprep.subr.bf16.mxu0 0
    %587 = vmatpush1.bf16.msra.mxu0 %v565
    %588 = vmatprep.subr.bf16.mxu0 0
    %589 = vmatpush1.bf16.msra.mxu0 %v564
    %590 = vmatprep.subr.bf16.mxu0 0
    %591 = vmatpush1.bf16.msra.mxu0 %v563
    %592 = vmatprep.subr.bf16.mxu0 0
    %593 = vmatpush1.bf16.msra.mxu0 %v562
    %594 = vmatprep.subr.bf16.mxu0 0
    %595 = vmatpush2.bf16.msra.mxu0 0
    %596 = vmatprep.subr.bf16.mxu0 0
    %597 = vmatpush2.bf16.msra.mxu0 0
    %598 = vmatprep.subr.bf16.mxu0 0
    %599 = vmatpush2.bf16.msra.mxu0 0
    %600 = vmatprep.subr.bf16.mxu0 0
    %601 = vmatpush2.bf16.msra.mxu0 0
    %602 = vmatprep.subr.bf16.mxu0 0
    %603 = vmatpush2.bf16.msra.mxu0 0
    %604 = vmatprep.subr.bf16.mxu0 0
    %605 = vmatpush2.bf16.msra.mxu0 0
    %606 = vmatprep.subr.bf16.mxu0 0
    %607 = vmatpush2.bf16.msra.mxu0 0
    %608 = vmatprep.subr.bf16.mxu0 0
    %609 = vmatpush2.bf16.msra.mxu0 0
    %610 = vmatprep.mubr.bf16.mxu0 0
    %611 = vmatmul.mubr.bf16.gmra.mxu0 %v514
    %v612 = vpop.f32.mrf.mxu0
    %v613 = vadd.f32 0.0, %v612
    %v614 = vpop.f32.mrf.mxu0
    %v615 = vpop.f32.mrf.mxu0
    %v616 = vadd.f32 0.0, %v615
    %v617 = vpop.f32.mrf.mxu0
    %618 = vmatprep.mubr.bf16.mxu0 0
    %619 = vmatmul.mubr.bf16.gmra.mxu0 %v515
    %v620 = vpop.f32.mrf.mxu0
    %v621 = vadd.f32 0.0, %v620
    %v622 = vpop.f32.mrf.mxu0
    %v623 = vpop.f32.mrf.mxu0
    %v624 = vadd.f32 0.0, %v623
    %v625 = vpop.f32.mrf.mxu0
    %626 = vmatprep.mubr.bf16.mxu0 0
    %627 = vmatmul.mubr.bf16.gmra.mxu0 %v516
    %v628 = vpop.f32.mrf.mxu0
    %v629 = vadd.f32 0.0, %v628
    %v630 = vpop.f32.mrf.mxu0
    %v631 = vpop.f32.mrf.mxu0
    %v632 = vadd.f32 0.0, %v631
    %v633 = vpop.f32.mrf.mxu0
    %634 = vmatprep.mubr.bf16.mxu0 0
    %635 = vmatmul.mubr.bf16.gmra.mxu0 %v517
    %v636 = vpop.f32.mrf.mxu0
    %v637 = vadd.f32 0.0, %v636
    %v638 = vpop.f32.mrf.mxu0
    %v639 = vpop.f32.mrf.mxu0
    %v640 = vadd.f32 0.0, %v639
    %v641 = vpop.f32.mrf.mxu0
    %642 = vmatprep.mubr.bf16.mxu0 0
    %643 = vmatmul.mubr.bf16.gmra.mxu0 %v518
    %v644 = vpop.f32.mrf.mxu0
    %v645 = vadd.f32 0.0, %v644
    %v646 = vpop.f32.mrf.mxu0
    %v647 = vpop.f32.mrf.mxu0
    %v648 = vadd.f32 0.0, %v647
    %v649 = vpop.f32.mrf.mxu0
    %650 = vmatprep.mubr.bf16.mxu0 0
    %651 = vmatmul.mubr.bf16.gmra.mxu0 %v519
    %v652 = vpop.f32.mrf.mxu0
    %v653 = vadd.f32 0.0, %v652
    %v654 = vpop.f32.mrf.mxu0
    %v655 = vpop.f32.mrf.mxu0
    %v656 = vadd.f32 0.0, %v655
    %v657 = vpop.f32.mrf.mxu0
    %658 = vmatprep.mubr.bf16.mxu0 0
    %659 = vmatmul.mubr.bf16.gmra.mxu0 %v520
    %v660 = vpop.f32.mrf.mxu0
    %v661 = vadd.f32 0.0, %v660
    %v662 = vpop.f32.mrf.mxu0
    %v663 = vpop.f32.mrf.mxu0
    %v664 = vadd.f32 0.0, %v663
    %v665 = vpop.f32.mrf.mxu0
    %666 = vmatprep.mubr.bf16.mxu0 0
    %667 = vmatmul.mubr.bf16.gmra.mxu0 %v521
    %v668 = vpop.f32.mrf.mxu0
    %v669 = vadd.f32 0.0, %v668
    %v670 = vpop.f32.mrf.mxu0
    %v671 = vpop.f32.mrf.mxu0
    %v672 = vadd.f32 0.0, %v671
    %v673 = vpop.f32.mrf.mxu0
    %674 = vdwg.mxu0
    %v691 = vunpack.c.l.b16 %v434
    %v692 = vunpack.c.l.b16 %v435
    %v693 = vunpack.c.l.b16 %v436
    %v694 = vunpack.c.l.b16 %v437
    %v695 = vunpack.c.l.b16 %v438
    %v696 = vunpack.c.l.b16 %v439
    %v697 = vunpack.c.l.b16 %v440
    %v698 = vunpack.c.l.b16 %v441
    %v699 = vunpack.c.l.b16 %v442
    %v700 = vunpack.c.l.b16 %v443
    %v701 = vunpack.c.l.b16 %v444
    %v702 = vunpack.c.l.b16 %v445
    %v703 = vunpack.c.l.b16 %v446
    %v704 = vunpack.c.l.b16 %v447
    %v705 = vunpack.c.l.b16 %v448
    %v706 = vunpack.c.l.b16 %v449
    %v707 = vpack.c.b16 %v692, %v691
    %v708 = vpack.c.b16 %v694, %v693
    %v709 = vpack.c.b16 %v696, %v695
    %v710 = vpack.c.b16 %v698, %v697
    %v711 = vpack.c.b16 %v700, %v699
    %v712 = vpack.c.b16 %v702, %v701
    %v713 = vpack.c.b16 %v704, %v703
    %v714 = vpack.c.b16 %v706, %v705
    %723 = vmatprep.subr.bf16.mxu0 0
    %724 = vmatpush1.bf16.msra.mxu0 %v714
    %725 = vmatprep.subr.bf16.mxu0 0
    %726 = vmatpush1.bf16.msra.mxu0 %v713
    %727 = vmatprep.subr.bf16.mxu0 0
    %728 = vmatpush1.bf16.msra.mxu0 %v712
    %729 = vmatprep.subr.bf16.mxu0 0
    %730 = vmatpush1.bf16.msra.mxu0 %v711
    %731 = vmatprep.subr.bf16.mxu0 0
    %732 = vmatpush1.bf16.msra.mxu0 %v710
    %733 = vmatprep.subr.bf16.mxu0 0
    %734 = vmatpush1.bf16.msra.mxu0 %v709
    %735 = vmatprep.subr.bf16.mxu0 0
    %736 = vmatpush1.bf16.msra.mxu0 %v708
    %737 = vmatprep.subr.bf16.mxu0 0
    %738 = vmatpush1.bf16.msra.mxu0 %v707
    %739 = vmatprep.subr.bf16.mxu0 0
    %740 = vmatpush2.bf16.msra.mxu0 0
    %741 = vmatprep.subr.bf16.mxu0 0
    %742 = vmatpush2.bf16.msra.mxu0 0
    %743 = vmatprep.subr.bf16.mxu0 0
    %744 = vmatpush2.bf16.msra.mxu0 0
    %745 = vmatprep.subr.bf16.mxu0 0
    %746 = vmatpush2.bf16.msra.mxu0 0
    %747 = vmatprep.subr.bf16.mxu0 0
    %748 = vmatpush2.bf16.msra.mxu0 0
    %749 = vmatprep.subr.bf16.mxu0 0
    %750 = vmatpush2.bf16.msra.mxu0 0
    %751 = vmatprep.subr.bf16.mxu0 0
    %752 = vmatpush2.bf16.msra.mxu0 0
    %753 = vmatprep.subr.bf16.mxu0 0
    %754 = vmatpush2.bf16.msra.mxu0 0
    %755 = vmatprep.mubr.bf16.mxu0 0
    %756 = vmatmul.mubr.bf16.gmra.mxu0 %v426
    %v757 = vpop.f32.mrf.mxu0
    %v758 = vadd.f32 %v613, %v757
    %v759 = vpop.f32.mrf.mxu0
    %v760 = vpop.f32.mrf.mxu0
    %v761 = vadd.f32 %v616, %v760
    %v762 = vpop.f32.mrf.mxu0
    %763 = vmatprep.mubr.bf16.mxu0 0
    %764 = vmatmul.mubr.bf16.gmra.mxu0 %v427
    %v765 = vpop.f32.mrf.mxu0
    %v766 = vadd.f32 %v621, %v765
    %v767 = vpop.f32.mrf.mxu0
    %v768 = vpop.f32.mrf.mxu0
    %v769 = vadd.f32 %v624, %v768
    %v770 = vpop.f32.mrf.mxu0
    %771 = vmatprep.mubr.bf16.mxu0 0
    %772 = vmatmul.mubr.bf16.gmra.mxu0 %v428
    %v773 = vpop.f32.mrf.mxu0
    %v774 = vadd.f32 %v629, %v773
    %v775 = vpop.f32.mrf.mxu0
    %v776 = vpop.f32.mrf.mxu0
    %v777 = vadd.f32 %v632, %v776
    %v778 = vpop.f32.mrf.mxu0
    %779 = vmatprep.mubr.bf16.mxu0 0
    %780 = vmatmul.mubr.bf16.gmra.mxu0 %v429
    %v781 = vpop.f32.mrf.mxu0
    %v782 = vadd.f32 %v637, %v781
    %v783 = vpop.f32.mrf.mxu0
    %v784 = vpop.f32.mrf.mxu0
    %v785 = vadd.f32 %v640, %v784
    %v786 = vpop.f32.mrf.mxu0
    %787 = vmatprep.mubr.bf16.mxu0 0
    %788 = vmatmul.mubr.bf16.gmra.mxu0 %v430
    %v789 = vpop.f32.mrf.mxu0
    %v790 = vadd.f32 %v645, %v789
    %v791 = vpop.f32.mrf.mxu0
    %v792 = vpop.f32.mrf.mxu0
    %v793 = vadd.f32 %v648, %v792
    %v794 = vpop.f32.mrf.mxu0
    %795 = vmatprep.mubr.bf16.mxu0 0
    %796 = vmatmul.mubr.bf16.gmra.mxu0 %v431
    %v797 = vpop.f32.mrf.mxu0
    %v798 = vadd.f32 %v653, %v797
    %v799 = vpop.f32.mrf.mxu0
    %v800 = vpop.f32.mrf.mxu0
    %v801 = vadd.f32 %v656, %v800
    %v802 = vpop.f32.mrf.mxu0
    %803 = vmatprep.mubr.bf16.mxu0 0
    %804 = vmatmul.mubr.bf16.gmra.mxu0 %v432
    %v805 = vpop.f32.mrf.mxu0
    %v806 = vadd.f32 %v661, %v805
    %v807 = vpop.f32.mrf.mxu0
    %v808 = vpop.f32.mrf.mxu0
    %v809 = vadd.f32 %v664, %v808
    %v810 = vpop.f32.mrf.mxu0
    %811 = vmatprep.mubr.bf16.mxu0 0
    %812 = vmatmul.mubr.bf16.gmra.mxu0 %v433
    %v813 = vpop.f32.mrf.mxu0
    %v814 = vadd.f32 %v669, %v813
    %v815 = vpop.f32.mrf.mxu0
    %v816 = vpop.f32.mrf.mxu0
    %v817 = vadd.f32 %v672, %v816
    %v818 = vpop.f32.mrf.mxu0
    %819 = vdwg.mxu0
    %v820 = vld [vmem:[%s6] sm:$0x1]
    %v822 = vlaneseq
    %v823 = vshrl.u32 %v822, 7
    %v824 = vsub.s32 0, %v823
    %v825 = vrot.slane %v820, %v824
    %v827 = vadd.f32 %v758, %v825
    %v828 = vadd.f32 %v761, %v825
    %v829 = vadd.f32 %v766, %v825
    %v830 = vadd.f32 %v769, %v825
    %v831 = vadd.f32 %v774, %v825
    %v832 = vadd.f32 %v777, %v825
    %v833 = vadd.f32 %v782, %v825
    %v834 = vadd.f32 %v785, %v825
    %v835 = vadd.f32 %v790, %v825
    %v836 = vadd.f32 %v793, %v825
    %v837 = vadd.f32 %v798, %v825
    %v838 = vadd.f32 %v801, %v825
    %v839 = vadd.f32 %v806, %v825
    %v840 = vadd.f32 %v809, %v825
    %v841 = vadd.f32 %v814, %v825
    %v842 = vadd.f32 %v817, %v825
    %v843 = vmax.f32 %v827, 0.0
    %v844 = vmax.f32 %v828, 0.0
    %v845 = vmax.f32 %v829, 0.0
    %v846 = vmax.f32 %v830, 0.0
    %v847 = vmax.f32 %v831, 0.0
    %v848 = vmax.f32 %v832, 0.0
    %v849 = vmax.f32 %v833, 0.0
    %v850 = vmax.f32 %v834, 0.0
    %v851 = vmax.f32 %v835, 0.0
    %v852 = vmax.f32 %v836, 0.0
    %v853 = vmax.f32 %v837, 0.0
    %v854 = vmax.f32 %v838, 0.0
    %v855 = vmax.f32 %v839, 0.0
    %v856 = vmax.f32 %v840, 0.0
    %v857 = vmax.f32 %v841, 0.0
    %v858 = vmax.f32 %v842, 0.0
    %v859 = vpack.c.bf16 %v844, %v843
    %v860 = vpack.c.bf16 %v846, %v845
    %v861 = vpack.c.bf16 %v848, %v847
    %v862 = vpack.c.bf16 %v850, %v849
    %v863 = vpack.c.bf16 %v852, %v851
    %v864 = vpack.c.bf16 %v854, %v853
    %v865 = vpack.c.bf16 %v856, %v855
    %v866 = vpack.c.bf16 %v858, %v857
    %v875 = vunpack.c.l.b16 %v859
    %v876 = vunpack.c.h.b16 %v859
    %v877 = vunpack.c.l.b16 %v860
    %v878 = vunpack.c.h.b16 %v860
    %v879 = vunpack.c.l.b16 %v861
    %v880 = vunpack.c.h.b16 %v861
    %v881 = vunpack.c.l.b16 %v862
    %v882 = vunpack.c.h.b16 %v862
    %v883 = vunpack.c.l.b16 %v863
    %v884 = vunpack.c.h.b16 %v863
    %v885 = vunpack.c.l.b16 %v864
    %v886 = vunpack.c.h.b16 %v864
    %v887 = vunpack.c.l.b16 %v865
    %v888 = vunpack.c.h.b16 %v865
    %v889 = vunpack.c.l.b16 %v866
    %v890 = vunpack.c.h.b16 %v866
    %v891 = vpack.c.b16 %v875, %v875
    %v892 = vpack.c.b16 %v876, %v876
    %v893 = vpack.c.b16 %v877, %v877
    %v894 = vpack.c.b16 %v878, %v878
    %v895 = vpack.c.b16 %v879, %v879
    %v896 = vpack.c.b16 %v880, %v880
    %v897 = vpack.c.b16 %v881, %v881
    %v898 = vpack.c.b16 %v882, %v882
    %v899 = vpack.c.b16 %v883, %v883
    %v900 = vpack.c.b16 %v884, %v884
    %v901 = vpack.c.b16 %v885, %v885
    %v902 = vpack.c.b16 %v886, %v886
    %v903 = vpack.c.b16 %v887, %v887
    %v904 = vpack.c.b16 %v888, %v888
    %v905 = vpack.c.b16 %v889, %v889
    %v906 = vpack.c.b16 %v890, %v890
    %923 = vst [vmem:[#allocation10] sm:$0xf] %v891
    %924 = vst [vmem:[#allocation10 + $0x4] sm:$0xf] %v892
    %925 = vst [vmem:[#allocation10 + $0x8] sm:$0xf] %v893
    %926 = vst [vmem:[#allocation10 + $0xc] sm:$0xf] %v894
    %927 = vst [vmem:[#allocation10 + $0x10] sm:$0xf] %v895
    %928 = vst [vmem:[#allocation10 + $0x14] sm:$0xf] %v896
    %929 = vst [vmem:[#allocation10 + $0x18] sm:$0xf] %v897
    %930 = vst [vmem:[#allocation10 + $0x1c] sm:$0xf] %v898
    %931 = vst [vmem:[#allocation10 + $0x20] sm:$0xf] %v899
    %932 = vst [vmem:[#allocation10 + $0x24] sm:$0xf] %v900
    %933 = vst [vmem:[#allocation10 + $0x28] sm:$0xf] %v901
    %934 = vst [vmem:[#allocation10 + $0x2c] sm:$0xf] %v902
    %935 = vst [vmem:[#allocation10 + $0x30] sm:$0xf] %v903
    %936 = vst [vmem:[#allocation10 + $0x34] sm:$0xf] %v904
    %937 = vst [vmem:[#allocation10 + $0x38] sm:$0xf] %v905
    %938 = vst [vmem:[#allocation10 + $0x3c] sm:$0xf] %v906
    %v939 = vld [vmem:[#allocation8] sm:$0xf]
    %v940 = vld [vmem:[#allocation8 + $0x4] sm:$0xf]
    %v941 = vld [vmem:[#allocation8 + $0x8] sm:$0xf]
    %v942 = vld [vmem:[#allocation8 + $0xc] sm:$0xf]
    %v943 = vld [vmem:[#allocation8 + $0x10] sm:$0xf]
    %v944 = vld [vmem:[#allocation8 + $0x14] sm:$0xf]
    %v945 = vld [vmem:[#allocation8 + $0x18] sm:$0xf]
    %v946 = vld [vmem:[#allocation8 + $0x1c] sm:$0xf]
    %v947 = vld [vmem:[#allocation8 + $0x20] sm:$0xf]
    %v948 = vld [vmem:[#allocation8 + $0x24] sm:$0xf]
    %v949 = vld [vmem:[#allocation8 + $0x28] sm:$0xf]
    %v950 = vld [vmem:[#allocation8 + $0x2c] sm:$0xf]
    %v951 = vld [vmem:[#allocation8 + $0x30] sm:$0xf]
    %v952 = vld [vmem:[#allocation8 + $0x34] sm:$0xf]
    %v953 = vld [vmem:[#allocation8 + $0x38] sm:$0xf]
    %v954 = vld [vmem:[#allocation8 + $0x3c] sm:$0xf]
    %v971 = vunpack.c.l.b16 %v939
    %v972 = vunpack.c.l.b16 %v940
    %v973 = vunpack.c.l.b16 %v941
    %v974 = vunpack.c.l.b16 %v942
    %v975 = vunpack.c.l.b16 %v943
    %v976 = vunpack.c.l.b16 %v944
    %v977 = vunpack.c.l.b16 %v945
    %v978 = vunpack.c.l.b16 %v946
    %v979 = vunpack.c.l.b16 %v947
    %v980 = vunpack.c.l.b16 %v948
    %v981 = vunpack.c.l.b16 %v949
    %v982 = vunpack.c.l.b16 %v950
    %v983 = vunpack.c.l.b16 %v951
    %v984 = vunpack.c.l.b16 %v952
    %v985 = vunpack.c.l.b16 %v953
    %v986 = vunpack.c.l.b16 %v954
    %v987 = vpack.c.b16 %v972, %v971
    %v988 = vpack.c.b16 %v974, %v973
    %v989 = vpack.c.b16 %v976, %v975
    %v990 = vpack.c.b16 %v978, %v977
    %v991 = vpack.c.b16 %v980, %v979
    %v992 = vpack.c.b16 %v982, %v981
    %v993 = vpack.c.b16 %v984, %v983
    %v994 = vpack.c.b16 %v986, %v985
    %1003 = vmatprep.subr.bf16.mxu0 0
    %1004 = vmatpush1.bf16.msra.mxu0 %v994
    %1005 = vmatprep.subr.bf16.mxu0 0
    %1006 = vmatpush1.bf16.msra.mxu0 %v993
    %1007 = vmatprep.subr.bf16.mxu0 0
    %1008 = vmatpush1.bf16.msra.mxu0 %v992
    %1009 = vmatprep.subr.bf16.mxu0 0
    %1010 = vmatpush1.bf16.msra.mxu0 %v991
    %1011 = vmatprep.subr.bf16.mxu0 0
    %1012 = vmatpush1.bf16.msra.mxu0 %v990
    %1013 = vmatprep.subr.bf16.mxu0 0
    %1014 = vmatpush1.bf16.msra.mxu0 %v989
    %1015 = vmatprep.subr.bf16.mxu0 0
    %1016 = vmatpush1.bf16.msra.mxu0 %v988
    %1017 = vmatprep.subr.bf16.mxu0 0
    %1018 = vmatpush1.bf16.msra.mxu0 %v987
    %1019 = vmatprep.subr.bf16.mxu0 0
    %1020 = vmatpush2.bf16.msra.mxu0 0
    %1021 = vmatprep.subr.bf16.mxu0 0
    %1022 = vmatpush2.bf16.msra.mxu0 0
    %1023 = vmatprep.subr.bf16.mxu0 0
    %1024 = vmatpush2.bf16.msra.mxu0 0
    %1025 = vmatprep.subr.bf16.mxu0 0
    %1026 = vmatpush2.bf16.msra.mxu0 0
    %1027 = vmatprep.subr.bf16.mxu0 0
    %1028 = vmatpush2.bf16.msra.mxu0 0
    %1029 = vmatprep.subr.bf16.mxu0 0
    %1030 = vmatpush2.bf16.msra.mxu0 0
    %1031 = vmatprep.subr.bf16.mxu0 0
    %1032 = vmatpush2.bf16.msra.mxu0 0
    %1033 = vmatprep.subr.bf16.mxu0 0
    %1034 = vmatpush2.bf16.msra.mxu0 0
    %1035 = vmatprep.mubr.bf16.mxu0 0
    %1036 = vmatmul.mubr.bf16.gmra.mxu0 %v859
    %v1037 = vpop.f32.mrf.mxu0
    %v1038 = vadd.f32 0.0, %v1037
    %v1039 = vpop.f32.mrf.mxu0
    %v1040 = vpop.f32.mrf.mxu0
    %v1041 = vadd.f32 0.0, %v1040
    %v1042 = vpop.f32.mrf.mxu0
    %1043 = vmatprep.mubr.bf16.mxu0 0
    %1044 = vmatmul.mubr.bf16.gmra.mxu0 %v860
    %v1045 = vpop.f32.mrf.mxu0
    %v1046 = vadd.f32 0.0, %v1045
    %v1047 = vpop.f32.mrf.mxu0
    %v1048 = vpop.f32.mrf.mxu0
    %v1049 = vadd.f32 0.0, %v1048
    %v1050 = vpop.f32.mrf.mxu0
    %1051 = vmatprep.mubr.bf16.mxu0 0
    %1052 = vmatmul.mubr.bf16.gmra.mxu0 %v861
    %v1053 = vpop.f32.mrf.mxu0
    %v1054 = vadd.f32 0.0, %v1053
    %v1055 = vpop.f32.mrf.mxu0
    %v1056 = vpop.f32.mrf.mxu0
    %v1057 = vadd.f32 0.0, %v1056
    %v1058 = vpop.f32.mrf.mxu0
    %1059 = vmatprep.mubr.bf16.mxu0 0
    %1060 = vmatmul.mubr.bf16.gmra.mxu0 %v862
    %v1061 = vpop.f32.mrf.mxu0
    %v1062 = vadd.f32 0.0, %v1061
    %v1063 = vpop.f32.mrf.mxu0
    %v1064 = vpop.f32.mrf.mxu0
    %v1065 = vadd.f32 0.0, %v1064
    %v1066 = vpop.f32.mrf.mxu0
    %1067 = vmatprep.mubr.bf16.mxu0 0
    %1068 = vmatmul.mubr.bf16.gmra.mxu0 %v863
    %v1069 = vpop.f32.mrf.mxu0
    %v1070 = vadd.f32 0.0, %v1069
    %v1071 = vpop.f32.mrf.mxu0
    %v1072 = vpop.f32.mrf.mxu0
    %v1073 = vadd.f32 0.0, %v1072
    %v1074 = vpop.f32.mrf.mxu0
    %1075 = vmatprep.mubr.bf16.mxu0 0
    %1076 = vmatmul.mubr.bf16.gmra.mxu0 %v864
    %v1077 = vpop.f32.mrf.mxu0
    %v1078 = vadd.f32 0.0, %v1077
    %v1079 = vpop.f32.mrf.mxu0
    %v1080 = vpop.f32.mrf.mxu0
    %v1081 = vadd.f32 0.0, %v1080
    %v1082 = vpop.f32.mrf.mxu0
    %1083 = vmatprep.mubr.bf16.mxu0 0
    %1084 = vmatmul.mubr.bf16.gmra.mxu0 %v865
    %v1085 = vpop.f32.mrf.mxu0
    %v1086 = vadd.f32 0.0, %v1085
    %v1087 = vpop.f32.mrf.mxu0
    %v1088 = vpop.f32.mrf.mxu0
    %v1089 = vadd.f32 0.0, %v1088
    %v1090 = vpop.f32.mrf.mxu0
    %1091 = vmatprep.mubr.bf16.mxu0 0
    %1092 = vmatmul.mubr.bf16.gmra.mxu0 %v866
    %v1093 = vpop.f32.mrf.mxu0
    %v1094 = vadd.f32 0.0, %v1093
    %v1095 = vpop.f32.mrf.mxu0
    %v1096 = vpop.f32.mrf.mxu0
    %v1097 = vadd.f32 0.0, %v1096
    %v1098 = vpop.f32.mrf.mxu0
    %1099 = vdwg.mxu0
    %v1100 = vpack.c.bf16 %v1041, %v1038
    %v1101 = vpack.c.bf16 %v1049, %v1046
    %v1102 = vpack.c.bf16 %v1057, %v1054
    %v1103 = vpack.c.bf16 %v1065, %v1062
    %v1104 = vpack.c.bf16 %v1073, %v1070
    %v1105 = vpack.c.bf16 %v1081, %v1078
    %v1106 = vpack.c.bf16 %v1089, %v1086
    %v1107 = vpack.c.bf16 %v1097, %v1094
    %v1116 = vunpack.c.l.b16 %v1100
    %v1117 = vunpack.c.h.b16 %v1100
    %v1118 = vunpack.c.l.b16 %v1101
    %v1119 = vunpack.c.h.b16 %v1101
    %v1120 = vunpack.c.l.b16 %v1102
    %v1121 = vunpack.c.h.b16 %v1102
    %v1122 = vunpack.c.l.b16 %v1103
    %v1123 = vunpack.c.h.b16 %v1103
    %v1124 = vunpack.c.l.b16 %v1104
    %v1125 = vunpack.c.h.b16 %v1104
    %v1126 = vunpack.c.l.b16 %v1105
    %v1127 = vunpack.c.h.b16 %v1105
    %v1128 = vunpack.c.l.b16 %v1106
    %v1129 = vunpack.c.h.b16 %v1106
    %v1130 = vunpack.c.l.b16 %v1107
    %v1131 = vunpack.c.h.b16 %v1107
    %v1132 = vpack.c.b16 %v1116, %v1116
    %v1133 = vpack.c.b16 %v1117, %v1117
    %v1134 = vpack.c.b16 %v1118, %v1118
    %v1135 = vpack.c.b16 %v1119, %v1119
    %v1136 = vpack.c.b16 %v1120, %v1120
    %v1137 = vpack.c.b16 %v1121, %v1121
    %v1138 = vpack.c.b16 %v1122, %v1122
    %v1139 = vpack.c.b16 %v1123, %v1123
    %v1140 = vpack.c.b16 %v1124, %v1124
    %v1141 = vpack.c.b16 %v1125, %v1125
    %v1142 = vpack.c.b16 %v1126, %v1126
    %v1143 = vpack.c.b16 %v1127, %v1127
    %v1144 = vpack.c.b16 %v1128, %v1128
    %v1145 = vpack.c.b16 %v1129, %v1129
    %v1146 = vpack.c.b16 %v1130, %v1130
    %v1147 = vpack.c.b16 %v1131, %v1131
    %1164 = vst [vmem:[#allocation11] sm:$0xf] %v1132
    %1165 = vst [vmem:[#allocation11 + $0x4] sm:$0xf] %v1133
    %1166 = vst [vmem:[#allocation11 + $0x8] sm:$0xf] %v1134
    %1167 = vst [vmem:[#allocation11 + $0xc] sm:$0xf] %v1135
    %1168 = vst [vmem:[#allocation11 + $0x10] sm:$0xf] %v1136
    %1169 = vst [vmem:[#allocation11 + $0x14] sm:$0xf] %v1137
    %1170 = vst [vmem:[#allocation11 + $0x18] sm:$0xf] %v1138
    %1171 = vst [vmem:[#allocation11 + $0x1c] sm:$0xf] %v1139
    %1172 = vst [vmem:[#allocation11 + $0x20] sm:$0xf] %v1140
    %1173 = vst [vmem:[#allocation11 + $0x24] sm:$0xf] %v1141
    %1174 = vst [vmem:[#allocation11 + $0x28] sm:$0xf] %v1142
    %1175 = vst [vmem:[#allocation11 + $0x2c] sm:$0xf] %v1143
    %1176 = vst [vmem:[#allocation11 + $0x30] sm:$0xf] %v1144
    %1177 = vst [vmem:[#allocation11 + $0x34] sm:$0xf] %v1145
    %1178 = vst [vmem:[#allocation11 + $0x38] sm:$0xf] %v1146
    %1179 = vst [vmem:[#allocation11 + $0x3c] sm:$0xf] %v1147
    // Predicated region
    $region50: #{tpu_custom_call.1} parent=1 // pred_check
      _
    $region51: #{tpu_custom_call.1} parent=1 // pred_check_branch
      %1181 = sbr.rel (0) target = $region53
    $region52: #{tpu_custom_call.1} parent=1 // pred_region
      %s1183 = ssub.s32 1024, 1024
      %1184 = vsyncadd [#allocation4], %s1183
      %s1185 = sshll.u32 [#allocation10], 4
      %s1186 = int_to_ptr.vmem [resolvable:$true] %s1185
      %1191 = dma.vmem_to_hbm [thread:$0]  %s1186, 1024, %s8, [#allocation4], 64, 64, 4
    $region53: #{tpu_custom_call.1} parent=1 // pred_fallthru
      _
    // Predicated region
    $region54: #{tpu_custom_call.1} parent=1 // pred_check
      _
    $region55: #{tpu_custom_call.1} parent=1 // pred_check_branch
      %1193 = sbr.rel (0) target = $region57
    $region56: #{tpu_custom_call.1} parent=1 // pred_region
      %s1195 = ssub.s32 1024, 1024
      %1196 = vsyncadd [#allocation12], %s1195
      %s1197 = sshll.u32 [#allocation11], 4
      %s1198 = int_to_ptr.vmem [resolvable:$true] %s1197
      %1203 = dma.vmem_to_hbm [thread:$0]  %s1198, 1024, %s9, [#allocation12], 64, 64, 4
    $region57: #{tpu_custom_call.1} parent=1 // pred_fallthru
      _
    // Predicated region
    $region58: #{tpu_custom_call.1} parent=1 // pred_check
      _
    $region59: #{tpu_custom_call.1} parent=1 // pred_check_branch
      %1205 = sbr.rel (0) target = $region61
    $region60: #{tpu_custom_call.1} parent=1 // pred_region
      %1206 = dma.done [#allocation4], 1024
    $region61: #{tpu_custom_call.1} parent=1 // pred_fallthru
      _
    // Predicated region
    $region62: #{tpu_custom_call.1} parent=1 // pred_check
      _
    $region63: #{tpu_custom_call.1} parent=1 // pred_check_branch
      %1208 = sbr.rel (0) target = $region65
    $region64: #{tpu_custom_call.1} parent=1 // pred_region
      %1209 = dma.done [#allocation12], 1024
    $region65: #{tpu_custom_call.1} parent=1 // pred_fallthru
      _
    %1210 = vsyncpa [#allocation3], 1
    %1211 = vsyncpa [#allocation6], 1
    %1212 = vsyncpa [#allocation9], 1
    %1213 = vsyncpa [#allocation4], 1
    %1214 = vsyncpa [#allocation12], 1

</llo_original>
